<compile_context>
chip_gen: v6e
topology: v6e:2x2x1
jax: 0.10.0
libtpu: 0.0.40
codegen_flags: <defaults>
</compile_context>

<pallas_src>
import numpy as np

import jax
import jax.numpy as jnp
from jax.experimental import pallas as pl
from jax.experimental.pallas import tpu as pltpu


# Fixed configuration of the instantiated module.
_CIN = 4          # input channels (== up-conv output channels)
_CMID = 8         # down-conv output channels (== up-conv input channels)
_H = 16           # spatial height
_W = 16           # spatial width
_G = 10           # half-resolution grid side (8 valid positions + halo ring)
_L = 128          # lanes per batch element (>= _G * _G = 100)
_NEG_SLOPE = 0.2  # LeakyReLU slope
_KD = 4 * 4 * _CIN + 8   # 72: stacked contraction length of the down-conv matmul
_KU = 9 * _CMID + 8      # 80: stacked contraction length of the up-conv matmul

# Lane-read offsets (relative, within each element's 128-lane slab).
_DOWN_OFFS = tuple(th * _G + tw - (_G + 1) for th in range(2) for tw in range(2))  # -11,-10,-1,0
_UP_OFFS = tuple(uo * _G + vo for uo in range(3) for vo in range(3))               # 0..22


# ----------------------------------------------------------------------------
# In-kernel helpers
# ----------------------------------------------------------------------------
def _roll_lanes(x, off):
    """result[..., l] = x[..., (l + off) % BLK] via the XLU rotate unit.

    Wrap-around / cross-slab lanes only ever land on masked halo lanes (down conv)
    or on lanes that the host-side unpack discards (up conv).
    """
    blk = x.shape[-1]
    s = (-off) % blk
    return x if s == 0 else pltpu.roll(x, shift=s, axis=1)


def _unet_kernel(x_ref, wd_ref, wu_ref, msk_ref, o_ref):
    """Fused down-conv + LeakyReLU + transposed-conv + ReLU for B_TILE batch elements.

    x_ref  : (1, 16, BLK) f32  parity planes of pad(x,1); sublane = (ph*2+pw)*4 + cin,
                               lane = elem*128 + i*10 + j of the 10x10 half-res grid.
    wd_ref : (8, 72)  bf16     down weights grouped by plane shift; col 64 = bias, 65..71 = 0.
    wu_ref : (16, 80) bf16     up weights (rows = phase*4 + cout) grouped by read offset;
                               col 72 = bias (tiled per phase), 73..79 = 0.
    msk_ref: (1, BLK) f32      1.0 on the valid 8x8 interior of each 10x10 slab.
    o_ref  : (1, 16, BLK) f32  up-conv output only; rows = phase*4 + cout.
    """
    x16 = x_ref[0]                                   # (16, BLK) f32
    blk = x16.shape[-1]
    # Row 0 of this block feeds the folded bias column; rows 1..7 hit zero weight columns.
    ones8 = jnp.ones((8, blk), jnp.float32)

    # ---- down: Conv2d(4->8, 3x3, stride 2, pad 1) + LeakyReLU -> ONE MXU matmul ----
    rhs_d = jnp.concatenate(
        [_roll_lanes(x16, off) for off in _DOWN_OFFS] + [ones8],
        axis=0).astype(jnp.bfloat16)                                        # (72, BLK)
    acc_d = jnp.dot(wd_ref[...], rhs_d, preferred_element_type=jnp.float32)  # (8, BLK)
    acc_d = jnp.where(acc_d >= 0, acc_d, _NEG_SLOPE * acc_d)                 # LeakyReLU(0.2)
    yp = acc_d * msk_ref[...]                       # zero halo ring / pad lanes per slab

    # ---- up: ConvTranspose2d(8->4, 4x4, stride 2, pad 1) + ReLU -> ONE MXU matmul ----
    rhs_u = jnp.concatenate(
        [_roll_lanes(yp, off) for off in _UP_OFFS] + [ones8],
        axis=0).astype(jnp.bfloat16)                                        # (80, BLK)
    acc_u = jnp.dot(wu_ref[...], rhs_u, preferred_element_type=jnp.float32)  # (16, BLK)
    o_ref[0] = jnp.maximum(acc_u, 0.0)                                       # ReLU


# ----------------------------------------------------------------------------
# One-time parameter packing (hoisted out of the forward pass)
# ----------------------------------------------------------------------------
def pack_params(params):
    """Pack PyTorch-layout conv weights once; call at parameter-load time."""
    wd = jnp.asarray(params["down_w"], jnp.float32)   # (8, 4, 3, 3)  (out, in, kh, kw)
    bd = jnp.asarray(params["down_b"], jnp.float32)   # (8,)
    wu = jnp.asarray(params["up_w"], jnp.float32)     # (8, 4, 4, 4)  (in, out, kh, kw)
    bu = jnp.asarray(params["up_b"], jnp.float32)     # (4,)

    # Down: columns = (th*2+tw)*16 + (ph*2+pw)*4 + cin, then bias col + zero pad to 72.
    cols = []
    for th in range(2):
        for tw in range(2):
            for ph in range(2):
                for pw in range(2):
                    kh, kw = 2 * th + ph, 2 * tw + pw
                    if kh < 3 and kw < 3:
                        cols.append(wd[:, :, kh, kw])                       # (8, 4)
                    else:
                        cols.append(jnp.zeros((_CMID, _CIN), jnp.float32))
    wd_packed = jnp.concatenate(
        cols + [bd[:, None], jnp.zeros((_CMID, 7), jnp.float32)], axis=1)   # (8, 72)

    # Up: rows = phase*4 + cout; columns = (uo*3+vo)*8 + cin, then bias col + pad to 80.
    blocks = []
    for uo in range(3):
        for vo in range(3):
            rows = []
            for ra in range(2):
                for rb in range(2):
                    dh, dw = uo - ra, vo - rb
                    if dh in (0, 1) and dw in (0, 1):
                        kh, kw = 3 - 2 * dh - ra, 3 - 2 * dw - rb
                        rows.append(wu[:, :, kh, kw].T)                     # (4, 8)
                    else:
                        rows.append(jnp.zeros((_CIN, _CMID), jnp.float32))
            blocks.append(jnp.concatenate(rows, axis=0))                    # (16, 8)
    wu_packed = jnp.concatenate(
        blocks + [jnp.tile(bu, 4)[:, None], jnp.zeros((4 * _CIN, 7), jnp.float32)],
        axis=1)                                                             # (16, 80)

    return {"wd": wd_packed.astype(jnp.bfloat16),
            "wu": wu_packed.astype(jnp.bfloat16)}


def _interior_mask_np():
    l = np.arange(_L)
    r, c = l // _G, l % _G
    m = (l < _G * _G) & (r >= 1) & (r <= 8) & (c >= 1) & (c <= 8)
    return m.astype(np.float32).reshape(1, _L)


# ----------------------------------------------------------------------------
# Host-side layout plumbing (small fused XLA ops; no im2col duplication)
# ----------------------------------------------------------------------------
def _space_to_depth_lanes(x, nb, b_tile):
    """(N, 4, 16, 16) f32 -> (nb, 16, b_tile*128): parity planes of pad(x,1) on a 10x10
    grid, with batch packed along lanes (one 128-lane slab per element)."""
    n = x.shape[0]
    x = jnp.pad(x, ((0, nb * b_tile - n), (0, 0), (1, 1), (1, 1)))            # (NB, C, 18, 18)
    p = x.reshape(nb * b_tile, _CIN, 9, 2, 9, 2).transpose(0, 3, 5, 1, 2, 4)  # (NB, ph, pw, C, 9, 9)
    p = jnp.pad(p, ((0, 0),) * 4 + ((0, 1), (0, 1)))                          # -> 10x10 grid
    p = p.reshape(nb * b_tile, 4 * _CIN, _G * _G)
    p = jnp.pad(p, ((0, 0), (0, 0), (0, _L - _G * _G)))                       # (NB, 16, 128)
    return p.reshape(nb, b_tile, 4 * _CIN, _L).transpose(0, 2, 1, 3).reshape(
        nb, 4 * _CIN, b_tile * _L)


def _up_from_lanes(o_buf, n, b_tile):
    """(nb, 16, b_tile*128) kernel output -> (n, 4, 16, 16) up-conv result in NCHW."""
    nb = o_buf.shape[0]
    o = o_buf.reshape(nb, 4 * _CIN, b_tile, _L).transpose(0, 2, 1, 3)
    o = o.reshape(nb * b_tile, 4 * _CIN, _L)[:n, :, :_G * _G]
    o = o.reshape(n, 2, 2, _CIN, _G, _G)[..., :8, :8]                 # (n, ra, rb, c, a, b)
    return o.transpose(0, 3, 4, 1, 5, 2).reshape(n, _CIN, _H, _W)     # (n, c, 2a+ra, 2b+rb)


# ----------------------------------------------------------------------------
# MinimalUnet.forward  (is_sub=False, is_attention=False, withoutskip=False)
# ----------------------------------------------------------------------------
@jax.jit
def minimal_unet_forward(packed, x, mask=None):
    assert x.shape[1:] == (_CIN, _H, _W), x.shape
    n = x.shape[0]
    # Batch elements per grid step (lane-packed).  ~8 keeps vreg pressure reasonable
    # while widening the MXU lane dimension; for large n keep nb a multiple of 2 so
    # both v7x TensorCores get work via the "parallel" grid axis.
    b_tile = max(1, min(8, n))
    nb = (n + b_tile - 1) // b_tile
    blk = b_tile * _L

    x32 = x.astype(jnp.float32)
    x_lanes = _space_to_depth_lanes(x32, nb, b_tile)                 # (nb, 16, blk)
    msk = jnp.asarray(np.tile(_interior_mask_np(), (1, b_tile)))     # trace-time constant

    out_buf = pl.pallas_call(
        _unet_kernel,
        out_shape=jax.ShapeDtypeStruct((nb, 4 * _CIN, blk), jnp.float32),
        grid=(nb,),
        in_specs=[
            pl.BlockSpec((1, 4 * _CIN, blk), lambda i: (i, 0, 0)),   # activations
            pl.BlockSpec((_CMID, _KD), lambda i: (0, 0)),            # down weights (+bias)
            pl.BlockSpec((4 * _CIN, _KU), lambda i: (0, 0)),         # up weights (+bias)
            pl.BlockSpec((1, blk), lambda i: (0, 0)),                # interior mask
        ],
        out_specs=pl.BlockSpec((1, 4 * _CIN, blk), lambda i: (i, 0, 0)),
        compiler_params=pltpu.CompilerParams(dimension_semantics=("parallel",)),
    )(x_lanes, packed["wd"], packed["wu"], msk)

    up = _up_from_lanes(out_buf, n, b_tile)                          # (n, 4, 16, 16)
    x_out = jnp.concatenate([x32, up], axis=1)                       # bit-exact skip concat
    return x_out, mask


# ----------------------------------------------------------------------------
# Self-test
# ----------------------------------------------------------------------------
def _reference_forward(params, x):
    """Plain-XLA reference of the same forward pass (f32)."""
    dn = jax.lax.conv_general_dilated(
        x, params["down_w"], window_strides=(2, 2), padding=((1, 1), (1, 1)),
        dimension_numbers=("NCHW", "OIHW", "NCHW"))
    dn = dn + params["down_b"].reshape(1, -1, 1, 1)
    dn = jnp.where(dn >= 0, dn, _NEG_SLOPE * dn)
    wu = jnp.flip(params["up_w"], axis=(2, 3)).transpose(1, 0, 2, 3)   # (Cout, Cin, 4, 4)
    up = jax.lax.conv_general_dilated(
        dn, wu, window_strides=(1, 1), padding=((2, 2), (2, 2)),
        lhs_dilation=(2, 2), dimension_numbers=("NCHW", "OIHW", "NCHW"))
    up = jnp.maximum(up + params["up_b"].reshape(1, -1, 1, 1), 0.0)
    return jnp.concatenate([x, up], axis=1)


if __name__ == "__main__":
    key = jax.random.PRNGKey(0)
    kx, km, k1, k2, k3, k4 = jax.random.split(key, 6)

    x = jax.random.normal(kx, (2, 4, 16, 16), jnp.float32)             # NCHW
    mask = jax.random.uniform(km, (2, 1, 16, 16), jnp.float32)

    params = {
        "down_w": 0.1 * jax.random.normal(k1, (8, 4, 3, 3), jnp.float32),
        "down_b": 0.1 * jax.random.normal(k2, (8,), jnp.float32),
        "up_w": 0.1 * jax.random.normal(k3, (8, 4, 4, 4), jnp.float32),
        "up_b": 0.1 * jax.random.normal(k4, (4,), jnp.float32),
    }

    packed = pack_params(params)          # one-time packing, hoisted out of the forward
    x_out, mask_out = minimal_unet_forward(packed, x, mask)
    x_out = jax.block_until_ready(x_out)

    assert x_out.shape == (2, 8, 16, 16), x_out.shape
    assert mask_out.shape == (2, 1, 16, 16), mask_out.shape
    assert bool(jnp.all(jnp.isfinite(x_out)))
    # Skip channels must be a bit-exact copy of the input.
    assert bool(jnp.array_equal(x_out[:, :_CIN], x))
    # Up-conv channels vs. plain-XLA reference (bf16 MXU operands -> loose tolerance).
    ref = _reference_forward(params, x)
    assert bool(jnp.allclose(x_out, ref, atol=5e-2, rtol=5e-2)), \
        float(jnp.max(jnp.abs(x_out - ref)))

    print("KERNEL_OK")
</pallas_src>

<mosaic_0001>
module attributes {stable_mosaic.version = 11 : i64} {
  func.func @_unet_kernel(%arg0: i32, %arg1: memref<1x16x256xf32, #tpu.memory_space<vmem>>, %arg2: memref<8x72xbf16, #tpu.memory_space<vmem>>, %arg3: memref<16x80xbf16, #tpu.memory_space<vmem>>, %arg4: memref<1x256xf32, #tpu.memory_space<vmem>>, %arg5: memref<1x16x256xf32, #tpu.memory_space<vmem>>) attributes {dimension_semantics = [#tpu.dimension_semantics<parallel>], iteration_bounds = array<i64: 1>, scalar_prefetch = 0 : i64, scratch_operands = 0 : i64, tpu.core_type = #tpu.core_type<tc>, window_params = [{transform_indices = @transform_0, window_bounds = array<i64: 1, 16, 256>}, {pipeline_mode = #tpu.pipeline_mode<synchronous>, transform_indices = @transform_1, window_bounds = array<i64: 8, 72>}, {pipeline_mode = #tpu.pipeline_mode<synchronous>, transform_indices = @transform_2, window_bounds = array<i64: 16, 80>}, {pipeline_mode = #tpu.pipeline_mode<synchronous>, transform_indices = @transform_3, window_bounds = array<i64: 1, 256>}, {transform_indices = @transform_4, window_bounds = array<i64: 1, 16, 256>}]} {
    %c0 = arith.constant 0 : index
    %c0_0 = arith.constant 0 : index
    %c0_1 = arith.constant 0 : index
    %0 = vector.load %arg1[%c0, %c0_0, %c0_1] : memref<1x16x256xf32, #tpu.memory_space<vmem>>, vector<1x16x256xf32>
    %1 = vector.shape_cast %0 : vector<1x16x256xf32> to vector<16x256xf32>
    %cst = arith.constant 1.000000e+00 : f32
    %2 = vector.broadcast %cst : f32 to vector<8x256xf32>
    %c11_i32 = arith.constant 11 : i32
    %3 = tpu.dynamic_rotate %1 by %c11_i32 dim 1 : vector<16x256xf32>, i32 -> vector<16x256xf32>
    %c10_i32 = arith.constant 10 : i32
    %4 = tpu.dynamic_rotate %1 by %c10_i32 dim 1 : vector<16x256xf32>, i32 -> vector<16x256xf32>
    %c1_i32 = arith.constant 1 : i32
    %5 = tpu.dynamic_rotate %1 by %c1_i32 dim 1 : vector<16x256xf32>, i32 -> vector<16x256xf32>
    %6 = tpu.concatenate %3, %4, %5, %1, %2 in 0 : vector<16x256xf32>, vector<16x256xf32>, vector<16x256xf32>, vector<16x256xf32>, vector<8x256xf32> -> vector<72x256xf32>
    %7 = arith.truncf %6 : vector<72x256xf32> to vector<72x256xbf16>
    %c0_2 = arith.constant 0 : index
    %c0_3 = arith.constant 0 : index
    %8 = vector.load %arg2[%c0_2, %c0_3] : memref<8x72xbf16, #tpu.memory_space<vmem>>, vector<8x72xbf16>
    %cst_4 = arith.constant dense<0.000000e+00> : vector<8x256xf32>
    %9 = tpu.matmul %8, %7, %cst_4 {dimension_numbers = #tpu.dot_dimension_numbers<[1], [0], [0], [1], [0, 0, 1, 1], [], []>} : vector<8x72xbf16>, vector<72x256xbf16>, vector<8x256xf32> -> vector<8x256xf32>
    %cst_5 = arith.constant 0.000000e+00 : f32
    %10 = vector.broadcast %cst_5 : f32 to vector<8x256xf32>
    %11 = arith.cmpf oge, %9, %10 : vector<8x256xf32>
    %cst_6 = arith.constant 2.000000e-01 : f32
    %12 = vector.broadcast %cst_6 : f32 to vector<8x256xf32>
    %13 = arith.mulf %12, %9 : vector<8x256xf32>
    %14 = arith.select %11, %9, %13 : vector<8x256xi1>, vector<8x256xf32>
    %c0_7 = arith.constant 0 : index
    %c0_8 = arith.constant 0 : index
    %15 = vector.load %arg4[%c0_7, %c0_8] : memref<1x256xf32, #tpu.memory_space<vmem>>, vector<1x256xf32>
    %16 = vector.broadcast %15 : vector<1x256xf32> to vector<8x256xf32>
    %17 = arith.mulf %14, %16 : vector<8x256xf32>
    %c255_i32 = arith.constant 255 : i32
    %18 = tpu.dynamic_rotate %17 by %c255_i32 dim 1 : vector<8x256xf32>, i32 -> vector<8x256xf32>
    %c254_i32 = arith.constant 254 : i32
    %19 = tpu.dynamic_rotate %17 by %c254_i32 dim 1 : vector<8x256xf32>, i32 -> vector<8x256xf32>
    %c246_i32 = arith.constant 246 : i32
    %20 = tpu.dynamic_rotate %17 by %c246_i32 dim 1 : vector<8x256xf32>, i32 -> vector<8x256xf32>
    %c245_i32 = arith.constant 245 : i32
    %21 = tpu.dynamic_rotate %17 by %c245_i32 dim 1 : vector<8x256xf32>, i32 -> vector<8x256xf32>
    %c244_i32 = arith.constant 244 : i32
    %22 = tpu.dynamic_rotate %17 by %c244_i32 dim 1 : vector<8x256xf32>, i32 -> vector<8x256xf32>
    %c236_i32 = arith.constant 236 : i32
    %23 = tpu.dynamic_rotate %17 by %c236_i32 dim 1 : vector<8x256xf32>, i32 -> vector<8x256xf32>
    %c235_i32 = arith.constant 235 : i32
    %24 = tpu.dynamic_rotate %17 by %c235_i32 dim 1 : vector<8x256xf32>, i32 -> vector<8x256xf32>
    %c234_i32 = arith.constant 234 : i32
    %25 = tpu.dynamic_rotate %17 by %c234_i32 dim 1 : vector<8x256xf32>, i32 -> vector<8x256xf32>
    %26 = tpu.concatenate %17, %18, %19, %20, %21, %22, %23, %24, %25, %2 in 0 : vector<8x256xf32>, vector<8x256xf32>, vector<8x256xf32>, vector<8x256xf32>, vector<8x256xf32>, vector<8x256xf32>, vector<8x256xf32>, vector<8x256xf32>, vector<8x256xf32>, vector<8x256xf32> -> vector<80x256xf32>
    %27 = arith.truncf %26 : vector<80x256xf32> to vector<80x256xbf16>
    %c0_9 = arith.constant 0 : index
    %c0_10 = arith.constant 0 : index
    %28 = vector.load %arg3[%c0_9, %c0_10] : memref<16x80xbf16, #tpu.memory_space<vmem>>, vector<16x80xbf16>
    %cst_11 = arith.constant dense<0.000000e+00> : vector<16x256xf32>
    %29 = tpu.matmul %28, %27, %cst_11 {dimension_numbers = #tpu.dot_dimension_numbers<[1], [0], [0], [1], [0, 0, 1, 1], [], []>} : vector<16x80xbf16>, vector<80x256xbf16>, vector<16x256xf32> -> vector<16x256xf32>
    %cst_12 = arith.constant 0.000000e+00 : f32
    %30 = vector.broadcast %cst_12 : f32 to vector<16x256xf32>
    %31 = arith.maximumf %29, %30 : vector<16x256xf32>
    %c0_13 = arith.constant 0 : index
    %c0_14 = arith.constant 0 : index
    %c0_15 = arith.constant 0 : index
    %32 = vector.load %arg5[%c0_13, %c0_14, %c0_15] : memref<1x16x256xf32, #tpu.memory_space<vmem>>, vector<1x16x256xf32>
    %33 = vector.shape_cast %32 : vector<1x16x256xf32> to vector<16x256xf32>
    %34 = vector.shape_cast %31 : vector<16x256xf32> to vector<1x16x256xf32>
    tpu.vector_store %arg5[%c0_13, %c0_14, %c0_15], %34 {strides = array<i32>} : memref<1x16x256xf32, #tpu.memory_space<vmem>>, vector<1x16x256xf32>,
    return
  }
  func.func @transform_0(%arg0: i32) -> (i32, i32, i32) {
    %c0_i32 = arith.constant 0 : i32
    %c0_i32_0 = arith.constant 0 : i32
    %c0_i32_1 = arith.constant 0 : i32
    return %arg0, %c0_i32, %c0_i32_0 : i32, i32, i32
  }
  func.func @transform_1(%arg0: i32) -> (i32, i32) {
    %c0_i32 = arith.constant 0 : i32
    %c0_i32_0 = arith.constant 0 : i32
    %c0_i32_1 = arith.constant 0 : i32
    return %c0_i32, %c0_i32_0 : i32, i32
  }
  func.func @transform_2(%arg0: i32) -> (i32, i32) {
    %c0_i32 = arith.constant 0 : i32
    %c0_i32_0 = arith.constant 0 : i32
    %c0_i32_1 = arith.constant 0 : i32
    return %c0_i32, %c0_i32_0 : i32, i32
  }
  func.func @transform_3(%arg0: i32) -> (i32, i32) {
    %c0_i32 = arith.constant 0 : i32
    %c0_i32_0 = arith.constant 0 : i32
    %c0_i32_1 = arith.constant 0 : i32
    return %c0_i32, %c0_i32_0 : i32, i32
  }
  func.func @transform_4(%arg0: i32) -> (i32, i32, i32) {
    %c0_i32 = arith.constant 0 : i32
    %c0_i32_0 = arith.constant 0 : i32
    %c0_i32_1 = arith.constant 0 : i32
    return %arg0, %c0_i32, %c0_i32_0 : i32, i32, i32
  }
}

</mosaic_0001>

<llo_original>
// kernel: minimal_unet_forward.1
$region0: #{minimal_unet_forward.1}
  #allocation0 [shape = 'u32[]', space=smem, size = 0x4, offset = 0x4, fixed_abs, tag = 'smem constant byte address 0x4 - core index']
  #allocation1 [shape = 'u32[144,128]{1,0:T(1,128)}', space=vmem, size = 0x12000, scoped, tag = 'internal scratch']
  %s0 = inlined_call_operand.vmem [shape: f32[1,16,256], index: 0, kind: input, shape index: {}]
  %s1 = inlined_call_operand.vmem [shape: bf16[8,72], index: 1, kind: input, shape index: {}]
  %s2 = inlined_call_operand.vmem [shape: bf16[16,80], index: 2, kind: input, shape index: {}]
  %s3 = inlined_call_operand.vmem [shape: f32[1,256], index: 3, kind: input, shape index: {}]
  %s4 = inlined_call_operand.vmem [shape: f32[1,16,256], index: 4, kind: output, shape index: {}]
  %s5 = sld [smem:[#allocation0]]
  $region26: #{minimal_unet_forward.1} parent=0
    _
  %s7 = ssub.s32 1, %s5
  %s8 = scalar_select 0, %s7, %s5
  // Predicated region
  $region2: #{minimal_unet_forward.1} parent=0 // pred_check
    _
  $region3: #{minimal_unet_forward.1} parent=0 // pred_check_branch
    %10 = sbr.rel (0) target = $region5
  $region4: #{minimal_unet_forward.1} parent=0 // pred_region
    _
  $region5: #{minimal_unet_forward.1} parent=0 // pred_fallthru
    _
  // Predicated region
  $region6: #{minimal_unet_forward.1} parent=0 // pred_check
    _
  $region7: #{minimal_unet_forward.1} parent=0 // pred_check_branch
    %12 = sbr.rel (0) target = $region9
  $region8: #{minimal_unet_forward.1} parent=0 // pred_region
    _
  $region9: #{minimal_unet_forward.1} parent=0 // pred_fallthru
    _
  // Predicated region
  $region10: #{minimal_unet_forward.1} parent=0 // pred_check
    _
  $region11: #{minimal_unet_forward.1} parent=0 // pred_check_branch
    %14 = sbr.rel (0) target = $region13
  $region12: #{minimal_unet_forward.1} parent=0 // pred_region
    _
  $region13: #{minimal_unet_forward.1} parent=0 // pred_fallthru
    _
  // Predicated region
  $region14: #{minimal_unet_forward.1} parent=0 // pred_check
    _
  $region15: #{minimal_unet_forward.1} parent=0 // pred_check_branch
    %16 = sbr.rel (0) target = $region17
  $region16: #{minimal_unet_forward.1} parent=0 // pred_region
    _
  $region17: #{minimal_unet_forward.1} parent=0 // pred_fallthru
    _
  %v18 = vld [vmem:[%s0] sm:$0xff]
  %v19 = vld [vmem:[%s0 + $0x8] sm:$0xff]
  %v20 = vld [vmem:[%s0 + $0x10] sm:$0xff]
  %v21 = vld [vmem:[%s0 + $0x18] sm:$0xff]
  %22 = vrot.lane.b32.xlu0 %v18, 11
  %v23 = vpop.permute.xlu0 %22
  %24 = vrot.lane.b32.xlu0 %v20, 11
  %v25 = vpop.permute.xlu0 %24
  %26 = vrot.lane.b32.xlu0 %v19, 11
  %v27 = vpop.permute.xlu0 %26
  %28 = vrot.lane.b32.xlu0 %v21, 11
  %v29 = vpop.permute.xlu0 %28
  %v30 = vlaneseq
  %v31 = vand.u32 %v30, 127
  %vm32 = vcmp.lt.s32.totalorder %v31, 11
  %v33 = vsel %vm32, %v23, %v27
  %v34 = vsel %vm32, %v25, %v29
  %v35 = vsel %vm32, %v27, %v23
  %v36 = vsel %vm32, %v29, %v25
  %37 = vrot.lane.b32.xlu0 %v18, 10
  %v38 = vpop.permute.xlu0 %37
  %39 = vrot.lane.b32.xlu0 %v20, 10
  %v40 = vpop.permute.xlu0 %39
  %41 = vrot.lane.b32.xlu0 %v19, 10
  %v42 = vpop.permute.xlu0 %41
  %43 = vrot.lane.b32.xlu0 %v21, 10
  %v44 = vpop.permute.xlu0 %43
  %vm45 = vcmp.lt.s32.totalorder %v31, 10
  %v46 = vsel %vm45, %v38, %v42
  %v47 = vsel %vm45, %v40, %v44
  %v48 = vsel %vm45, %v42, %v38
  %v49 = vsel %vm45, %v44, %v40
  %50 = vrot.lane.b32.xlu0 %v18, 1
  %v51 = vpop.permute.xlu0 %50
  %52 = vrot.lane.b32.xlu0 %v20, 1
  %v53 = vpop.permute.xlu0 %52
  %54 = vrot.lane.b32.xlu0 %v19, 1
  %v55 = vpop.permute.xlu0 %54
  %56 = vrot.lane.b32.xlu0 %v21, 1
  %v57 = vpop.permute.xlu0 %56
  %vm58 = vcmp.lt.s32.totalorder %v31, 1
  %v59 = vsel %vm58, %v51, %v55
  %v60 = vsel %vm58, %v53, %v57
  %v61 = vsel %vm58, %v55, %v51
  %v62 = vsel %vm58, %v57, %v53
  %v63 = vpack.c.bf16 %v36, %v35
  %v64 = vpack.c.bf16 %v34, %v33
  %v65 = vpack.c.bf16 %v49, %v48
  %v66 = vpack.c.bf16 %v47, %v46
  %v67 = vpack.c.bf16 %v62, %v61
  %v68 = vpack.c.bf16 %v60, %v59
  %v69 = vpack.c.bf16 %v20, %v18
  %v70 = vpack.c.bf16 %v21, %v19
  %v71 = vpack.c.bf16 1.0, 1.0
  %v72 = vld [vmem:[%s1] sm:$0xf]
  %vm73 = vcmask 588800
  %v75 = vsel %vm73, %v72, 0
  %vm77 = vcmask 1043456
  %v79 = vsel %vm77, %v71, 0
  %81 = vmatprep.subr.bf16.mxu0 0
  %82 = vmatpush1.bf16.msra.mxu0 0
  %83 = vmatprep.subr.bf16.mxu0 0
  %84 = vmatpush1.bf16.msra.mxu0 0
  %85 = vmatprep.subr.bf16.mxu0 0
  %86 = vmatpush1.bf16.msra.mxu0 0
  %87 = vmatprep.subr.bf16.mxu0 %v79
  %88 = vmatpush1.bf16.msra.mxu0 %v79
  %89 = vmatprep.subr.bf16.mxu0 %v70
  %90 = vmatpush1.bf16.msra.mxu0 %v69
  %91 = vmatprep.subr.bf16.mxu0 %v68
  %92 = vmatpush1.bf16.msra.mxu0 %v67
  %93 = vmatprep.subr.bf16.mxu0 %v66
  %94 = vmatpush1.bf16.msra.mxu0 %v65
  %95 = vmatprep.subr.bf16.mxu0 %v64
  %96 = vmatpush1.bf16.msra.mxu0 %v63
  %97 = vmatprep.subr.bf16.mxu0 0
  %98 = vmatpush2.bf16.msra.mxu0 0
  %99 = vmatprep.subr.bf16.mxu0 0
  %100 = vmatpush2.bf16.msra.mxu0 0
  %101 = vmatprep.subr.bf16.mxu0 0
  %102 = vmatpush2.bf16.msra.mxu0 0
  %103 = vmatprep.subr.bf16.mxu0 0
  %104 = vmatpush2.bf16.msra.mxu0 0
  %105 = vmatprep.subr.bf16.mxu0 0
  %106 = vmatpush2.bf16.msra.mxu0 0
  %107 = vmatprep.subr.bf16.mxu0 0
  %108 = vmatpush2.bf16.msra.mxu0 0
  %109 = vmatprep.subr.bf16.mxu0 0
  %110 = vmatpush2.bf16.msra.mxu0 0
  %111 = vmatprep.subr.bf16.mxu0 0
  %112 = vmatpush2.bf16.msra.mxu0 0
  %113 = vmatprep.mubr.bf16.mxu0 0
  %114 = vmatmul.mubr.bf16.gmra.mxu0 %v75
  %v115 = vpop.f32.mrf.mxu0
  %v116 = vadd.f32 0.0, %v115
  %v117 = vpop.f32.mrf.mxu0
  %v118 = vadd.f32 0.0, %v117
  %v119 = vpop.f32.mrf.mxu0
  %v120 = vpop.f32.mrf.mxu0
  %121 = vdwg.mxu0
  %vm122 = vcmp.ge.f32.partialorder %v116, 0.0
  %vm123 = vcmp.ge.f32.partialorder %v118, 0.0
  %v124 = vmul.f32 %v116, 0.2
  %v125 = vmul.f32 %v118, 0.2
  %v126 = vsel %vm122, %v116, %v124
  %v127 = vsel %vm123, %v118, %v125
  %v128 = vld [vmem:[%s3] sm:$0x3]
  %v130 = vlaneseq
  %v131 = vshrl.u32 %v130, 7
  %v132 = vsub.s32 0, %v131
  %v133 = vrot.slane %v128, %v132
  %v134 = vlaneseq
  %v135 = vshrl.u32 %v134, 7
  %v136 = vsub.s32 1, %v135
  %v137 = vrot.slane %v128, %v136
  %v140 = vmul.f32 %v126, %v133
  %v141 = vmul.f32 %v127, %v137
  %142 = vrot.lane.b32.xlu0 %v140, 127
  %v143 = vpop.permute.xlu0 %142
  %144 = vrot.lane.b32.xlu0 %v141, 127
  %v145 = vpop.permute.xlu0 %144
  %vm146 = vcmp.lt.s32.totalorder %v31, 127
  %v147 = vsel %vm146, %v143, %v145
  %v148 = vsel %vm146, %v145, %v143
  %149 = vrot.lane.b32.xlu0 %v140, 126
  %v150 = vpop.permute.xlu0 %149
  %151 = vrot.lane.b32.xlu0 %v141, 126
  %v152 = vpop.permute.xlu0 %151
  %vm153 = vcmp.lt.s32.totalorder %v31, 126
  %v154 = vsel %vm153, %v150, %v152
  %v155 = vsel %vm153, %v152, %v150
  %156 = vrot.lane.b32.xlu0 %v140, 118
  %v157 = vpop.permute.xlu0 %156
  %158 = vrot.lane.b32.xlu0 %v141, 118
  %v159 = vpop.permute.xlu0 %158
  %vm160 = vcmp.lt.s32.totalorder %v31, 118
  %v161 = vsel %vm160, %v157, %v159
  %v162 = vsel %vm160, %v159, %v157
  %163 = vrot.lane.b32.xlu0 %v140, 117
  %v164 = vpop.permute.xlu0 %163
  %165 = vrot.lane.b32.xlu0 %v141, 117
  %v166 = vpop.permute.xlu0 %165
  %vm167 = vcmp.lt.s32.totalorder %v31, 117
  %v168 = vsel %vm167, %v164, %v166
  %v169 = vsel %vm167, %v166, %v164
  %170 = vrot.lane.b32.xlu0 %v140, 116
  %v171 = vpop.permute.xlu0 %170
  %172 = vrot.lane.b32.xlu0 %v141, 116
  %v173 = vpop.permute.xlu0 %172
  %vm174 = vcmp.lt.s32.totalorder %v31, 116
  %v175 = vsel %vm174, %v171, %v173
  %v176 = vsel %vm174, %v173, %v171
  %177 = vrot.lane.b32.xlu0 %v140, 108
  %v178 = vpop.permute.xlu0 %177
  %179 = vrot.lane.b32.xlu0 %v141, 108
  %v180 = vpop.permute.xlu0 %179
  %vm181 = vcmp.lt.s32.totalorder %v31, 108
  %v182 = vsel %vm181, %v178, %v180
  %v183 = vsel %vm181, %v180, %v178
  %184 = vrot.lane.b32.xlu0 %v140, 107
  %v185 = vpop.permute.xlu0 %184
  %186 = vrot.lane.b32.xlu0 %v141, 107
  %v187 = vpop.permute.xlu0 %186
  %vm188 = vcmp.lt.s32.totalorder %v31, 107
  %v189 = vsel %vm188, %v185, %v187
  %v190 = vsel %vm188, %v187, %v185
  %191 = vrot.lane.b32.xlu0 %v140, 106
  %v192 = vpop.permute.xlu0 %191
  %193 = vrot.lane.b32.xlu0 %v141, 106
  %v194 = vpop.permute.xlu0 %193
  %vm195 = vcmp.lt.s32.totalorder %v31, 106
  %v196 = vsel %vm195, %v192, %v194
  %v197 = vsel %vm195, %v194, %v192
  %v198 = vpack.c.bf16 %v147, %v140
  %v199 = vpack.c.bf16 %v148, %v141
  %v200 = vpack.c.bf16 %v161, %v154
  %v201 = vpack.c.bf16 %v162, %v155
  %v202 = vpack.c.bf16 %v175, %v168
  %v203 = vpack.c.bf16 %v176, %v169
  %v204 = vpack.c.bf16 %v189, %v182
  %v205 = vpack.c.bf16 %v190, %v183
  %v206 = vpack.c.bf16 1.0, %v196
  %v207 = vpack.c.bf16 1.0, %v197
  %v208 = vld [vmem:[%s2] sm:$0xf]
  %v209 = vld [vmem:[%s2 + $0x4] sm:$0xf]
  %v212 = vunpack.c.l.b16 %v208
  %v213 = vunpack.c.l.b16 %v209
  %v214 = vpack.c.b16 %v213, %v212
  %vm215 = vcmask 654336
  %v217 = vsel %vm215, %v214, 0
  %219 = vmatprep.subr.bf16.mxu0 0
  %220 = vmatpush1.bf16.msra.mxu0 0
  %221 = vmatprep.subr.bf16.mxu0 0
  %222 = vmatpush1.bf16.msra.mxu0 0
  %223 = vmatprep.subr.bf16.mxu0 0
  %224 = vmatpush1.bf16.msra.mxu0 0
  %225 = vmatprep.subr.bf16.mxu0 %v207
  %226 = vmatpush1.bf16.msra.mxu0 %v206
  %227 = vmatprep.subr.bf16.mxu0 %v205
  %228 = vmatpush1.bf16.msra.mxu0 %v204
  %229 = vmatprep.subr.bf16.mxu0 %v203
  %230 = vmatpush1.bf16.msra.mxu0 %v202
  %231 = vmatprep.subr.bf16.mxu0 %v201
  %232 = vmatpush1.bf16.msra.mxu0 %v200
  %233 = vmatprep.subr.bf16.mxu0 %v199
  %234 = vmatpush1.bf16.msra.mxu0 %v198
  %235 = vmatprep.subr.bf16.mxu0 0
  %236 = vmatpush2.bf16.msra.mxu0 0
  %237 = vmatprep.subr.bf16.mxu0 0
  %238 = vmatpush2.bf16.msra.mxu0 0
  %239 = vmatprep.subr.bf16.mxu0 0
  %240 = vmatpush2.bf16.msra.mxu0 0
  %241 = vmatprep.subr.bf16.mxu0 0
  %242 = vmatpush2.bf16.msra.mxu0 0
  %243 = vmatprep.subr.bf16.mxu0 0
  %244 = vmatpush2.bf16.msra.mxu0 0
  %245 = vmatprep.subr.bf16.mxu0 0
  %246 = vmatpush2.bf16.msra.mxu0 0
  %247 = vmatprep.subr.bf16.mxu0 0
  %248 = vmatpush2.bf16.msra.mxu0 0
  %249 = vmatprep.subr.bf16.mxu0 0
  %250 = vmatpush2.bf16.msra.mxu0 0
  %251 = vmatprep.mubr.bf16.mxu0 0
  %252 = vmatmul.mubr.bf16.gmra.mxu0 %v217
  %v253 = vpop.f32.mrf.mxu0
  %v254 = vadd.f32 0.0, %v253
  %v255 = vpop.f32.mrf.mxu0
  %v256 = vadd.f32 0.0, %v255
  %v257 = vpop.f32.mrf.mxu0
  %v258 = vadd.f32 0.0, %v257
  %v259 = vpop.f32.mrf.mxu0
  %v260 = vadd.f32 0.0, %v259
  %261 = vdwg.mxu0
  %v262 = vmax.f32 %v254, 0.0
  %v263 = vmax.f32 %v256, 0.0
  %v264 = vmax.f32 %v258, 0.0
  %v265 = vmax.f32 %v260, 0.0
  %266 = vst [vmem:[%s4] sm:$0xff] %v262
  %267 = vst [vmem:[%s4 + $0x8] sm:$0xff] %v263
  %268 = vst [vmem:[%s4 + $0x10] sm:$0xff] %v264
  %269 = vst [vmem:[%s4 + $0x18] sm:$0xff] %v265
  // Predicated region
  $region18: #{minimal_unet_forward.1} parent=0 // pred_check
    _
  $region19: #{minimal_unet_forward.1} parent=0 // pred_check_branch
    %271 = sbr.rel (0) target = $region21
  $region20: #{minimal_unet_forward.1} parent=0 // pred_region
    _
  $region21: #{minimal_unet_forward.1} parent=0 // pred_fallthru
    _
  // Predicated region
  $region22: #{minimal_unet_forward.1} parent=0 // pred_check
    _
  $region23: #{minimal_unet_forward.1} parent=0 // pred_check_branch
    %273 = sbr.rel (0) target = $region25
  $region24: #{minimal_unet_forward.1} parent=0 // pred_region
    _
  $region25: #{minimal_unet_forward.1} parent=0 // pred_fallthru
    _

</llo_original>
